<compile_context>
chip_gen: v7x
topology: tpu7x:2x2x1
jax: 0.10.0
libtpu: 0.0.40
codegen_flags: <defaults>
</compile_context>

<pallas_src>
import math

import jax
import jax.numpy as jnp
from jax.experimental import pallas as pl
from jax.experimental.pallas import tpu as pltpu

LATENT_DIM = 20
HIDDEN_DIM = 400   # fc1 out / fc2 in: 400 = 25*16, sublane-aligned for bf16/f32
OUTPUT_DIM = 784   # 28*28 MNIST
OUTPUT_PAD = 896   # 7*128: lane-dense output / W2 columns (padded cols are zero)


def _round_up(x, m):
    return (x + m - 1) // m * m


def decoder_kernel(z_ref, w1_ref, b1_ref, w2_ref, b2_ref, out_ref):
    # fc1: bf16 operands, f32 MXU accumulation; bias + ReLU in f32 on the VPU.
    h = jnp.dot(z_ref[...], w1_ref[...], preferred_element_type=jnp.float32)
    h = jnp.maximum(h + b1_ref[...], 0.0)
    # fc2 on the current block of output columns (full 896 or a 128-wide slice).
    logits = jnp.dot(h.astype(jnp.bfloat16), w2_ref[...],
                     preferred_element_type=jnp.float32)
    logits = logits + b2_ref[...]
    # sigmoid(x) = 0.5 * tanh(0.5*x) + 0.5 : one EUP op + one VPU FMA.
    out_ref[...] = (0.5 * jnp.tanh(0.5 * logits) + 0.5).astype(out_ref.dtype)


def prepare_params(w1, b1, w2, b2):
    """Cast matmul weights to bf16 and zero-pad output columns to OUTPUT_PAD.

    w1: (latent, hidden), b1: (hidden,), w2: (hidden, out), b2: (out,)
    (transpose of PyTorch Linear.weight). Hidden dim (400) is left unpadded.
    Done once outside the kernel so per-call HBM traffic is only the small
    bf16 weights + f32 biases.
    """
    w1p = jnp.asarray(w1, jnp.float32).astype(jnp.bfloat16)            # (20, 400)
    b1p = jnp.asarray(b1, jnp.float32).reshape(1, HIDDEN_DIM)          # (1, 400)
    w2p = (jnp.zeros((HIDDEN_DIM, OUTPUT_PAD), jnp.float32)
           .at[:, :OUTPUT_DIM].set(w2)).astype(jnp.bfloat16)           # (400, 896)
    b2p = jnp.zeros((1, OUTPUT_PAD), jnp.float32).at[:, :OUTPUT_DIM].set(b2)
    return w1p, b1p, w2p, b2p


def decoder_forward(z, w1p, b1p, w2p, b2p, *, tb=512, out_dtype=jnp.bfloat16):
    """z: (B, latent) f32. Returns (B, OUTPUT_DIM) reconstruction in [0, 1]."""
    B, latent = z.shape
    tb = min(tb, _round_up(B, 8))          # don't over-pad tiny batches
    b_pad = _round_up(B, tb)
    b_tiles = b_pad // tb

    # Small-batch path: split the output columns into 128-wide blocks so v7x's
    # two TensorCores each fetch ~half of W2 and compute half the columns.
    # Large-batch path: single full-width (896) lane-dense output tile; weights
    # stay VMEM-resident across batch tiles via constant index maps.
    tn = 128 if b_tiles == 1 else OUTPUT_PAD
    n_tiles = OUTPUT_PAD // tn

    z_pad = jnp.zeros((b_pad, latent), jnp.bfloat16).at[:B].set(
        z.astype(jnp.bfloat16))

    flops = 2 * b_pad * (latent * HIDDEN_DIM + HIDDEN_DIM * OUTPUT_PAD)
    bytes_accessed = (z_pad.size * 2 + w1p.size * 2 + w2p.size * 2
                      + b1p.size * 4 + b2p.size * 4
                      + b_pad * OUTPUT_PAD * jnp.dtype(out_dtype).itemsize)

    out_pad = pl.pallas_call(
        decoder_kernel,
        out_shape=jax.ShapeDtypeStruct((b_pad, OUTPUT_PAD), out_dtype),
        grid_spec=pltpu.PrefetchScalarGridSpec(
            num_scalar_prefetch=0,
            grid=(b_tiles, n_tiles),
            in_specs=[
                # batch-tiled activations
                pl.BlockSpec((tb, latent), lambda i, j: (i, 0)),
                # weights/biases: constant (or j-only) index maps -> each block
                # DMA'd once, VMEM-resident across batch tiles.
                pl.BlockSpec((latent, HIDDEN_DIM), lambda i, j: (0, 0)),
                pl.BlockSpec((1, HIDDEN_DIM), lambda i, j: (0, 0)),
                pl.BlockSpec((HIDDEN_DIM, tn), lambda i, j: (0, j)),
                pl.BlockSpec((1, tn), lambda i, j: (0, j)),
            ],
            out_specs=pl.BlockSpec((tb, tn), lambda i, j: (i, j)),
        ),
        compiler_params=pltpu.CompilerParams(
            dimension_semantics=("parallel", "parallel"),
            vmem_limit_bytes=32 * 1024 * 1024),
        cost_estimate=pl.CostEstimate(
            flops=flops,
            transcendentals=b_pad * OUTPUT_PAD,   # one tanh per output element
            bytes_accessed=bytes_accessed),
    )(z_pad, w1p, b1p, w2p, b2p)

    return out_pad[:B, :OUTPUT_DIM]


def init_params(key, latent_dim, hidden_dim, output_dim):
    """Deterministic init matching PyTorch nn.Linear's U(-1/sqrt(fan_in), 1/sqrt(fan_in))."""
    k1, k2, k3, k4 = jax.random.split(key, 4)
    bound1 = 1.0 / math.sqrt(latent_dim)
    bound2 = 1.0 / math.sqrt(hidden_dim)
    # Stored as (in_features, out_features) = PyTorch weight transposed.
    w1 = jax.random.uniform(k1, (latent_dim, hidden_dim), jnp.float32, -bound1, bound1)
    b1 = jax.random.uniform(k2, (hidden_dim,), jnp.float32, -bound1, bound1)
    w2 = jax.random.uniform(k3, (hidden_dim, output_dim), jnp.float32, -bound2, bound2)
    b2 = jax.random.uniform(k4, (output_dim,), jnp.float32, -bound2, bound2)
    return w1, b1, w2, b2


if __name__ == "__main__":
    key = jax.random.PRNGKey(0)
    k_param, k_z = jax.random.split(key)

    batch = 8
    w1, b1, w2, b2 = init_params(k_param, LATENT_DIM, HIDDEN_DIM, OUTPUT_DIM)
    params = prepare_params(w1, b1, w2, b2)
    z = jax.random.normal(k_z, (batch, LATENT_DIM), jnp.float32)

    decoder_fn = jax.jit(decoder_forward)
    x_recon = decoder_fn(z, *params)
    jax.block_until_ready(x_recon)
    assert x_recon.shape == (batch, OUTPUT_DIM)

    x_recon_f32 = x_recon.astype(jnp.float32)

    # Pure-JAX reference of the same bf16-matmul / f32-accumulate forward pass.
    zb = z.astype(jnp.bfloat16)
    h_ref = jnp.maximum(
        jnp.dot(zb, w1.astype(jnp.bfloat16),
                preferred_element_type=jnp.float32) + b1, 0.0)
    x_ref = jax.nn.sigmoid(
        jnp.dot(h_ref.astype(jnp.bfloat16), w2.astype(jnp.bfloat16),
                preferred_element_type=jnp.float32) + b2)
    err = float(jnp.max(jnp.abs(x_recon_f32 - x_ref)))
    assert err < 1e-2, err   # bf16 output rounding + tanh-form sigmoid

    # Sanity: full-f32 PyTorch-equivalent forward agrees to bf16-level tolerance.
    h32 = jnp.maximum(z @ w1 + b1, 0.0)
    x32 = jax.nn.sigmoid(h32 @ w2 + b2)
    assert jnp.allclose(x_recon_f32, x32, atol=3e-2), \
        float(jnp.max(jnp.abs(x_recon_f32 - x32)))

    print("KERNEL_OK")
</pallas_src>

<mosaic_0001>
module attributes {stable_mosaic.version = 11 : i64} {
  func.func @decoder_kernel(%arg0: i32, %arg1: i32, %arg2: memref<8x20xbf16, #tpu.memory_space<vmem>>, %arg3: memref<20x400xbf16, #tpu.memory_space<vmem>>, %arg4: memref<1x400xf32, #tpu.memory_space<vmem>>, %arg5: memref<400x128xbf16, #tpu.memory_space<vmem>>, %arg6: memref<1x128xf32, #tpu.memory_space<vmem>>, %arg7: memref<8x128xbf16, #tpu.memory_space<vmem>>) attributes {dimension_semantics = [#tpu.dimension_semantics<parallel>, #tpu.dimension_semantics<parallel>], iteration_bounds = array<i64: 1, 7>, scalar_prefetch = 0 : i64, scratch_operands = 0 : i64, tpu.core_type = #tpu.core_type<tc>, window_params = [{transform_indices = @transform_0, window_bounds = array<i64: 8, 20>}, {pipeline_mode = #tpu.pipeline_mode<synchronous>, transform_indices = @transform_1, window_bounds = array<i64: 20, 400>}, {pipeline_mode = #tpu.pipeline_mode<synchronous>, transform_indices = @transform_2, window_bounds = array<i64: 1, 400>}, {transform_indices = @transform_3, window_bounds = array<i64: 400, 128>}, {transform_indices = @transform_4, window_bounds = array<i64: 1, 128>}, {transform_indices = @transform_5, window_bounds = array<i64: 8, 128>}]} {
    %c0 = arith.constant 0 : index
    %c0_0 = arith.constant 0 : index
    %0 = vector.load %arg2[%c0, %c0_0] : memref<8x20xbf16, #tpu.memory_space<vmem>>, vector<8x20xbf16>
    %c0_1 = arith.constant 0 : index
    %c0_2 = arith.constant 0 : index
    %1 = vector.load %arg3[%c0_1, %c0_2] : memref<20x400xbf16, #tpu.memory_space<vmem>>, vector<20x400xbf16>
    %cst = arith.constant dense<0.000000e+00> : vector<8x400xf32>
    %2 = tpu.matmul %0, %1, %cst {dimension_numbers = #tpu.dot_dimension_numbers<[1], [0], [0], [1], [0, 0, 1, 1], [], []>} : vector<8x20xbf16>, vector<20x400xbf16>, vector<8x400xf32> -> vector<8x400xf32>
    %c0_3 = arith.constant 0 : index
    %c0_4 = arith.constant 0 : index
    %3 = vector.load %arg4[%c0_3, %c0_4] : memref<1x400xf32, #tpu.memory_space<vmem>>, vector<1x400xf32>
    %4 = vector.broadcast %3 : vector<1x400xf32> to vector<8x400xf32>
    %5 = arith.addf %2, %4 : vector<8x400xf32>
    %cst_5 = arith.constant 0.000000e+00 : f32
    %6 = vector.broadcast %cst_5 : f32 to vector<8x400xf32>
    %7 = arith.maximumf %5, %6 : vector<8x400xf32>
    %8 = arith.truncf %7 : vector<8x400xf32> to vector<8x400xbf16>
    %c0_6 = arith.constant 0 : index
    %c0_7 = arith.constant 0 : index
    %9 = vector.load %arg5[%c0_6, %c0_7] : memref<400x128xbf16, #tpu.memory_space<vmem>>, vector<400x128xbf16>
    %cst_8 = arith.constant dense<0.000000e+00> : vector<8x128xf32>
    %10 = tpu.matmul %8, %9, %cst_8 {dimension_numbers = #tpu.dot_dimension_numbers<[1], [0], [0], [1], [0, 0, 1, 1], [], []>} : vector<8x400xbf16>, vector<400x128xbf16>, vector<8x128xf32> -> vector<8x128xf32>
    %c0_9 = arith.constant 0 : index
    %c0_10 = arith.constant 0 : index
    %11 = vector.load %arg6[%c0_9, %c0_10] : memref<1x128xf32, #tpu.memory_space<vmem>>, vector<1x128xf32>
    %12 = vector.broadcast %11 : vector<1x128xf32> to vector<8x128xf32>
    %13 = arith.addf %10, %12 : vector<8x128xf32>
    %cst_11 = arith.constant 5.000000e-01 : f32
    %14 = vector.broadcast %cst_11 : f32 to vector<8x128xf32>
    %15 = arith.mulf %14, %13 : vector<8x128xf32>
    %16 = math.tanh %15 : vector<8x128xf32>
    %cst_12 = arith.constant 5.000000e-01 : f32
    %17 = vector.broadcast %cst_12 : f32 to vector<8x128xf32>
    %18 = arith.mulf %17, %16 : vector<8x128xf32>
    %cst_13 = arith.constant 5.000000e-01 : f32
    %19 = vector.broadcast %cst_13 : f32 to vector<8x128xf32>
    %20 = arith.addf %18, %19 : vector<8x128xf32>
    %21 = arith.truncf %20 : vector<8x128xf32> to vector<8x128xbf16>
    %c0_14 = arith.constant 0 : index
    %c0_15 = arith.constant 0 : index
    %22 = vector.load %arg7[%c0_14, %c0_15] : memref<8x128xbf16, #tpu.memory_space<vmem>>, vector<8x128xbf16>
    tpu.vector_store %arg7[%c0_14, %c0_15], %21 {strides = array<i32>} : memref<8x128xbf16, #tpu.memory_space<vmem>>, vector<8x128xbf16>,
    return
  }
  func.func @transform_0(%arg0: i32, %arg1: i32) -> (i32, i32) {
    %c0_i32 = arith.constant 0 : i32
    %c0_i32_0 = arith.constant 0 : i32
    return %arg0, %c0_i32 : i32, i32
  }
  func.func @transform_1(%arg0: i32, %arg1: i32) -> (i32, i32) {
    %c0_i32 = arith.constant 0 : i32
    %c0_i32_0 = arith.constant 0 : i32
    %c0_i32_1 = arith.constant 0 : i32
    return %c0_i32, %c0_i32_0 : i32, i32
  }
  func.func @transform_2(%arg0: i32, %arg1: i32) -> (i32, i32) {
    %c0_i32 = arith.constant 0 : i32
    %c0_i32_0 = arith.constant 0 : i32
    %c0_i32_1 = arith.constant 0 : i32
    return %c0_i32, %c0_i32_0 : i32, i32
  }
  func.func @transform_3(%arg0: i32, %arg1: i32) -> (i32, i32) {
    %c0_i32 = arith.constant 0 : i32
    %c0_i32_0 = arith.constant 0 : i32
    return %c0_i32, %arg1 : i32, i32
  }
  func.func @transform_4(%arg0: i32, %arg1: i32) -> (i32, i32) {
    %c0_i32 = arith.constant 0 : i32
    %c0_i32_0 = arith.constant 0 : i32
    return %c0_i32, %arg1 : i32, i32
  }
  func.func @transform_5(%arg0: i32, %arg1: i32) -> (i32, i32) {
    %c0_i32 = arith.constant 0 : i32
    return %arg0, %arg1 : i32, i32
  }
}

</mosaic_0001>

<llo_original>
// kernel: decoder_forward.1
$region0: #{decoder_forward.1}
  #allocation0 [shape = 'u32[]', space=smem, size = 0x4, offset = 0x4, fixed_abs, tag = 'smem constant byte address 0x4 - core index']
  #allocation1 [shape = 'u32[144,128]{1,0:T(1,128)}', space=vmem, size = 0x12000, scoped, tag = 'internal scratch']
  %s0 = inlined_call_operand.vmem [shape: bf16[8,20], index: 0, kind: input, shape index: {}]
  %s1 = inlined_call_operand.hbm [shape: bf16[20,400], index: 1, kind: input, shape index: {}]
  %s2 = inlined_call_operand.vmem [shape: f32[1,400], index: 2, kind: input, shape index: {}]
  %s3 = inlined_call_operand.hbm [shape: bf16[400,896], index: 3, kind: input, shape index: {}]
  %s4 = inlined_call_operand.vmem [shape: f32[1,896], index: 4, kind: input, shape index: {}]
  %s5 = inlined_call_operand.hbm [shape: bf16[8,896], index: 5, kind: output, shape index: {}]
  %s6 = sld [smem:[#allocation0]]
  $region61: #{decoder_forward.1} parent=0
    _
  %s8 = ssub.s32 1, %s6
  %s9 = scalar_select 0, %s8, %s6
  $region1: #{decoder_forward.1} parent=0
    #allocation2 [shape = 'u8[24576]{0}', space=vmem, size = 0x6000, scoped, tag = 'input window, operand 1, single buffered']
    #allocation3 [shape = 's32[2]{0}', space=sflag, size = 0x8, scoped, tag = 'scoped memory for decoder_forward.1']
    #allocation4 [shape = 's32[2]{0}', space=sflag, size = 0x8, scoped, tag = 'scoped memory for decoder_forward.1']
    #allocation5 [shape = 'u8[204800]{0}', space=vmem, size = 0x32000, scoped, tag = 'input window, operand 3']
    #allocation6 [shape = 's32[2]{0}', space=sflag, size = 0x8, scoped, tag = 'scoped memory for decoder_forward.1']
    #allocation7 [shape = 'u8[4096]{0}', space=vmem, size = 0x1000, scoped, tag = 'output window, operand 0']
    %10 = vsyncpa [#allocation3], 0
    %11 = vsyncpa [#allocation6], 0
    %s12 = scalar_lea.sflag [#allocation6], 1
    %13 = vsyncpa %s12, 0
    %14 = vsyncpa [#allocation4], 0
    %s15 = scalar_lea.sflag [#allocation4], 1
    %16 = vsyncpa %s15, 0
    loop: start=0, step=1, limit=9
    $region2: #{decoder_forward.1} parent=1 // loop_pre_header
      _
    $region3: #{decoder_forward.1} parent=1 // loop_header
      %s18 = sphi 0, %s22
      %p19 = scmp.ge.s32.totalorder %s18, 9
      %s25 = sphi 0, %s37
      %s26 = sphi 0, %s33
      %s27 = sphi 0, %s25
      %s28 = sphi 0, %s26
      %s29 = sphi 0, %s27
      %s30 = sphi 0, %s28
      %s40 = sphi 0, %s42
      %s43 = sphi 0, %s40
      %s44 = sphi 0, %s43
      %s60 = sphi 0, %s44
      %s64 = sphi 0, %s64
      %s66 = sphi 0, %s64
      %s67 = sphi 0, %s66
      %s81 = sphi 0, %s67
      %s85 = sphi 0, %s85
      %s87 = sphi 0, %s85
      %s88 = sphi 0, %s87
      %s102 = sphi 0, %s88
      %s108 = sphi 0, %s110
      %s111 = sphi 0, %s108
      %s112 = sphi 0, %s111
      %s128 = sphi 0, %s112
      %s134 = sphi 0, %s136
      %s137 = sphi 0, %s134
      %s138 = sphi 0, %s137
      %s154 = sphi 0, %s138
      %s162 = sphi 0, %s164
      %s165 = sphi 0, %s162
      %s166 = sphi 0, %s165
      %s182 = sphi 0, %s166
    $region4: #{decoder_forward.1} parent=1 // loop_header_branch
      %21 = sbr.rel (%p19) target = $region8
    $region5: #{decoder_forward.1} parent=1 // loop_body
      %s23 = ssub.s32 %s18, 1
      %s24 = ssub.s32 %s18, 2
      %s31 = sadd.s32 1, %s26
      %p32 = scmp.ge.s32.totalorder %s31, 7
      %s33 = scalar_select %p32, 0, %s31
      %s34 = sadd.s32 1, %s25
      %s35 = scalar_select %p32, %s34, %s25
      %p36 = scmp.ge.s32.totalorder %s35, 1
      %s37 = scalar_select %p36, 0, %s35
      %s38 = ssub.s32 %s25, %s37
      %p39 = scmp.eq.s32.totalorder %s38, 0
      %s41 = sadd.s32 %s40, 1
      %s42 = scalar_select %p39, %s40, %s41
      %p45 = pneg %p39
      %p46 = scmp.eq.s32.totalorder %s18, 6
      %p47 = por %p45, %p46
      %p48 = scmp.ne.s32.totalorder %s40, %s43
      %p49 = scmp.eq.s32.totalorder %s18, 0
      %p50 = por %p48, %p49
      %p51 = scmp.ne.s32.totalorder %s40, %s43
      %p52 = scmp.eq.s32.totalorder %s23, 6
      %p53 = por %p51, %p52
      %p54 = scmp.ne.s32.totalorder %s43, %s44
      %p55 = scmp.eq.s32.totalorder %s23, 0
      %p56 = por %p54, %p55
      %p57 = scmp.ne.s32.totalorder %s43, %s44
      %p58 = scmp.eq.s32.totalorder %s24, 6
      %p59 = por %p57, %p58
      %p61 = scmp.ne.s32.totalorder %s44, %s60
      %p62 = scmp.eq.s32.totalorder %s24, 0
      %p63 = por %p61, %p62
      %s65 = sadd.s32 %s64, 1
      %p68 = scmp.eq.s32.totalorder %s18, 6
      %p69 = scmp.ne.s32.totalorder %s64, %s66
      %p70 = scmp.eq.s32.totalorder %s18, 0
      %p71 = por %p69, %p70
      %p72 = scmp.ne.s32.totalorder %s64, %s66
      %p73 = scmp.eq.s32.totalorder %s23, 6
      %p74 = por %p72, %p73
      %p75 = scmp.ne.s32.totalorder %s66, %s67
      %p76 = scmp.eq.s32.totalorder %s23, 0
      %p77 = por %p75, %p76
      %p78 = scmp.ne.s32.totalorder %s66, %s67
      %p79 = scmp.eq.s32.totalorder %s24, 6
      %p80 = por %p78, %p79
      %p82 = scmp.ne.s32.totalorder %s67, %s81
      %p83 = scmp.eq.s32.totalorder %s24, 0
      %p84 = por %p82, %p83
      %s86 = sadd.s32 %s85, 1
      %p89 = scmp.eq.s32.totalorder %s18, 6
      %p90 = scmp.ne.s32.totalorder %s85, %s87
      %p91 = scmp.eq.s32.totalorder %s18, 0
      %p92 = por %p90, %p91
      %p93 = scmp.ne.s32.totalorder %s85, %s87
      %p94 = scmp.eq.s32.totalorder %s23, 6
      %p95 = por %p93, %p94
      %p96 = scmp.ne.s32.totalorder %s87, %s88
      %p97 = scmp.eq.s32.totalorder %s23, 0
      %p98 = por %p96, %p97
      %p99 = scmp.ne.s32.totalorder %s87, %s88
      %p100 = scmp.eq.s32.totalorder %s24, 6
      %p101 = por %p99, %p100
      %p103 = scmp.ne.s32.totalorder %s88, %s102
      %p104 = scmp.eq.s32.totalorder %s24, 0
      %p105 = por %p103, %p104
      %s106 = ssub.s32 %s26, %s33
      %p107 = scmp.eq.s32.totalorder %s106, 0
      %s109 = sadd.s32 %s108, 1
      %s110 = scalar_select %p107, %s108, %s109
      %p113 = pneg %p107
      %p114 = scmp.eq.s32.totalorder %s18, 6
      %p115 = por %p113, %p114
      %p116 = scmp.ne.s32.totalorder %s108, %s111
      %p117 = scmp.eq.s32.totalorder %s18, 0
      %p118 = por %p116, %p117
      %p119 = scmp.ne.s32.totalorder %s108, %s111
      %p120 = scmp.eq.s32.totalorder %s23, 6
      %p121 = por %p119, %p120
      %p122 = scmp.ne.s32.totalorder %s111, %s112
      %p123 = scmp.eq.s32.totalorder %s23, 0
      %p124 = por %p122, %p123
      %p125 = scmp.ne.s32.totalorder %s111, %s112
      %p126 = scmp.eq.s32.totalorder %s24, 6
      %p127 = por %p125, %p126
      %p129 = scmp.ne.s32.totalorder %s112, %s128
      %p130 = scmp.eq.s32.totalorder %s24, 0
      %p131 = por %p129, %p130
      %s132 = ssub.s32 %s26, %s33
      %p133 = scmp.eq.s32.totalorder %s132, 0
      %s135 = sadd.s32 %s134, 1
      %s136 = scalar_select %p133, %s134, %s135
      %p139 = pneg %p133
      %p140 = scmp.eq.s32.totalorder %s18, 6
      %p141 = por %p139, %p140
      %p142 = scmp.ne.s32.totalorder %s134, %s137
      %p143 = scmp.eq.s32.totalorder %s18, 0
      %p144 = por %p142, %p143
      %p145 = scmp.ne.s32.totalorder %s134, %s137
      %p146 = scmp.eq.s32.totalorder %s23, 6
      %p147 = por %p145, %p146
      %p148 = scmp.ne.s32.totalorder %s137, %s138
      %p149 = scmp.eq.s32.totalorder %s23, 0
      %p150 = por %p148, %p149
      %p151 = scmp.ne.s32.totalorder %s137, %s138
      %p152 = scmp.eq.s32.totalorder %s24, 6
      %p153 = por %p151, %p152
      %p155 = scmp.ne.s32.totalorder %s138, %s154
      %p156 = scmp.eq.s32.totalorder %s24, 0
      %p157 = por %p155, %p156
      %s158 = ssub.s32 %s25, %s37
      %s159 = ssub.s32 %s26, %s33
      %s160 = sor.u32 %s158, %s159
      %p161 = scmp.eq.s32.totalorder %s160, 0
      %s163 = sadd.s32 %s162, 1
      %s164 = scalar_select %p161, %s162, %s163
      %p167 = pneg %p161
      %p168 = scmp.eq.s32.totalorder %s18, 6
      %p169 = por %p167, %p168
      %p170 = scmp.ne.s32.totalorder %s162, %s165
      %p171 = scmp.eq.s32.totalorder %s18, 0
      %p172 = por %p170, %p171
      %p173 = scmp.ne.s32.totalorder %s162, %s165
      %p174 = scmp.eq.s32.totalorder %s23, 6
      %p175 = por %p173, %p174
      %p176 = scmp.ne.s32.totalorder %s165, %s166
      %p177 = scmp.eq.s32.totalorder %s23, 0
      %p178 = por %p176, %p177
      %p179 = scmp.ne.s32.totalorder %s165, %s166
      %p180 = scmp.eq.s32.totalorder %s24, 6
      %p181 = por %p179, %p180
      %p183 = scmp.ne.s32.totalorder %s166, %s182
      %p184 = scmp.eq.s32.totalorder %s24, 0
      %p185 = por %p183, %p184
      %p186 = scmp.le.s32.totalorder 1, %s18
      %p187 = scmp.lt.s32.totalorder %s18, 8
      %p188 = pnand %p186, %p187
      %p189 = pneg %p188
      // Predicated region
      $region9: #{decoder_forward.1} parent=5 // pred_check
        _
      $region10: #{decoder_forward.1} parent=5 // pred_check_branch
        %191 = sbr.rel (%p188) target = $region12
      $region11: #{decoder_forward.1} parent=5 // pred_region
        %s192 = ssub.s32 %s18, 1
        // Predicated region
        $region13: #{decoder_forward.1} parent=11 // pred_check
          %p193 = pneg %p56
        $region14: #{decoder_forward.1} parent=11 // pred_check_branch
          %195 = sbr.rel (%p193) target = $region16
        $region15: #{decoder_forward.1} parent=11 // pred_region
          %p196 = scmp.lt.s32.totalorder %s27, 0
          %s197 = scalar_select %p196, %s27, 0
          %s198 = smul.addr %s197, 4
          %s199 = scalar_lea.vmem %s0, %s198
        $region16: #{decoder_forward.1} parent=11 // pred_fallthru
          _
        // Predicated region
        $region17: #{decoder_forward.1} parent=11 // pred_check
          %p200 = pneg %p77
        $region18: #{decoder_forward.1} parent=11 // pred_check_branch
          %202 = sbr.rel (%p200) target = $region20
        $region19: #{decoder_forward.1} parent=11 // pred_region
          %s204 = ssub.s32 768, 768
          %205 = vsyncadd [#allocation3], %s204
          %s206 = sshll.u32 [#allocation2], 4
          %s207 = int_to_ptr.vmem [resolvable:$true] %s206
          %212 = dma.hbm_to_vmem [thread:$0]  %s1, 768, %s207, [#allocation3], 256, 256, 16
        $region20: #{decoder_forward.1} parent=11 // pred_fallthru
          _
        // Predicated region
        $region21: #{decoder_forward.1} parent=11 // pred_check
          %p213 = pneg %p98
        $region22: #{decoder_forward.1} parent=11 // pred_check_branch
          %215 = sbr.rel (%p213) target = $region24
        $region23: #{decoder_forward.1} parent=11 // pred_region
          _
        $region24: #{decoder_forward.1} parent=11 // pred_fallthru
          _
      $region12: #{decoder_forward.1} parent=5 // pred_fallthru
        _
      %p216 = scmp.lt.s32.totalorder %s18, 7
      // Predicated region
      $region25: #{decoder_forward.1} parent=5 // pred_check
        %p217 = pneg %p216
      $region26: #{decoder_forward.1} parent=5 // pred_check_branch
        %219 = sbr.rel (%p217) target = $region28
      $region27: #{decoder_forward.1} parent=5 // pred_region
        // Predicated region
        $region29: #{decoder_forward.1} parent=27 // pred_check
          %p220 = pneg %p118
        $region30: #{decoder_forward.1} parent=27 // pred_check_branch
          %222 = sbr.rel (%p220) target = $region32
        $region31: #{decoder_forward.1} parent=27 // pred_region
          %s223 = sand.u32 %s108, 1
          %s224 = scalar_lea.sflag [#allocation6], %s223
          %s225 = sand.u32 %s108, 1
          %s226 = smul.addr %s225, 200
          %s227 = scalar_lea.vmem [#allocation5], %s226
          %s229 = ssub.s32 3200, 3200
          %230 = vsyncadd %s224, %s229
          %s231 = smul.addr %s26, 64
          %s232 = scalar_lea.hbm %s3, %s231
          %s233 = sshll.u32 %s227, 4
          %s234 = int_to_ptr.vmem [resolvable:$true] %s233
          %239 = dma.hbm_to_vmem [thread:$0]  %s232, 3200, %s234, %s224, 448, 64, 4
        $region32: #{decoder_forward.1} parent=27 // pred_fallthru
          _
        // Predicated region
        $region33: #{decoder_forward.1} parent=27 // pred_check
          %p240 = pneg %p144
        $region34: #{decoder_forward.1} parent=27 // pred_check_branch
          %242 = sbr.rel (%p240) target = $region36
        $region35: #{decoder_forward.1} parent=27 // pred_region
          %p243 = scmp.lt.s32.totalorder %s26, 6
          %s244 = scalar_select %p243, %s26, 6
          %s245 = scalar_lea.vmem %s4, %s244
        $region36: #{decoder_forward.1} parent=27 // pred_fallthru
          _
      $region28: #{decoder_forward.1} parent=5 // pred_fallthru
        _
      %p246 = scmp.le.s32.totalorder 1, %s18
      %p247 = scmp.lt.s32.totalorder %s18, 8
      %p248 = pnand %p246, %p247
      %p249 = pneg %p248
      // Predicated region
      $region37: #{decoder_forward.1} parent=5 // pred_check
        _
      $region38: #{decoder_forward.1} parent=5 // pred_check_branch
        %251 = sbr.rel (%p248) target = $region40
      $region39: #{decoder_forward.1} parent=5 // pred_region
        %s252 = ssub.s32 %s18, 1
        // Predicated region
        $region41: #{decoder_forward.1} parent=39 // pred_check
          %p253 = pneg %p77
        $region42: #{decoder_forward.1} parent=39 // pred_check_branch
          %255 = sbr.rel (%p253) target = $region44
        $region43: #{decoder_forward.1} parent=39 // pred_region
          %256 = dma.done [#allocation3], 768
        $region44: #{decoder_forward.1} parent=39 // pred_fallthru
          _
        %s257 = sand.u32 %s111, 1
        %s258 = scalar_lea.sflag [#allocation6], %s257
        %s259 = sand.u32 %s111, 1
        %s260 = smul.addr %s259, 200
        %s261 = scalar_lea.vmem [#allocation5], %s260
        // Predicated region
        $region45: #{decoder_forward.1} parent=39 // pred_check
          %p262 = pneg %p124
        $region46: #{decoder_forward.1} parent=39 // pred_check_branch
          %264 = sbr.rel (%p262) target = $region48
        $region47: #{decoder_forward.1} parent=39 // pred_region
          %265 = dma.done %s258, 3200
        $region48: #{decoder_forward.1} parent=39 // pred_fallthru
          _
        %p266 = scmp.lt.s32.totalorder %s27, 0
        %s267 = scalar_select %p266, %s27, 0
        %s268 = smul.addr %s267, 4
        %s269 = scalar_lea.vmem %s0, %s268
        %p270 = pneg %p56
        %p271 = pneg %p53
        %p272 = pneg %p77
        %p273 = pneg %p74
        %p274 = pneg %p98
        %p275 = pneg %p95
        %s276 = sand.u32 %s111, 1
        %s277 = scalar_lea.sflag [#allocation6], %s276
        %s278 = sand.u32 %s111, 1
        %s279 = smul.addr %s278, 200
        %s280 = scalar_lea.vmem [#allocation5], %s279
        %p281 = pneg %p124
        %p282 = pneg %p121
        %p283 = scmp.lt.s32.totalorder %s28, 6
        %s284 = scalar_select %p283, %s28, 6
        %s285 = scalar_lea.vmem %s4, %s284
        %p286 = pneg %p150
        %p287 = pneg %p147
        %p288 = pneg %p178
        %p289 = pneg %p175
        %s290 = sand.u32 %s165, 1
        %s291 = scalar_lea.sflag [#allocation4], %s290
        %s292 = sand.u32 %s165, 1
        %s293 = smul.addr %s292, 4
        %s294 = scalar_lea.vmem [#allocation7], %s293
        %p295 = scmp.lt.s32.totalorder %s27, 0
        %s296 = scalar_select %p295, %s27, 0
        %s297 = smul.addr %s296, 4
        %s298 = scalar_lea.vmem %s0, %s297
        %p299 = scmp.lt.s32.totalorder %s28, 6
        %s300 = scalar_select %p299, %s28, 6
        %s301 = scalar_lea.vmem %s4, %s300
        %v303 = vld [vmem:[%s298] sm:$0xf]
        %v304 = vld [vmem:[#allocation2] sm:$0xff]
        %v305 = vld [vmem:[#allocation2 + $0x8] sm:$0xff]
        %v306 = vld [vmem:[#allocation2 + $0x10] sm:$0xff]
        %v307 = vld [vmem:[#allocation2 + $0x18] sm:$0xff]
        %v308 = vld [vmem:[#allocation2 + $0x20] sm:$0x33]
        %v309 = vld [vmem:[#allocation2 + $0x28] sm:$0x33]
        %v310 = vld [vmem:[%s2] sm:$0xf]
        %v312 = vlaneseq
        %v313 = vshrl.u32 %v312, 7
        %v314 = vsub.s32 0, %v313
        %v315 = vrot.slane %v310, %v314
        %v316 = vlaneseq
        %v317 = vshrl.u32 %v316, 7
        %v318 = vsub.s32 1, %v317
        %v319 = vrot.slane %v310, %v318
        %v320 = vlaneseq
        %v321 = vshrl.u32 %v320, 7
        %v322 = vsub.s32 2, %v321
        %v323 = vrot.slane %v310, %v322
        %v324 = vlaneseq
        %v325 = vshrl.u32 %v324, 7
        %v326 = vsub.s32 3, %v325
        %v327 = vrot.slane %v310, %v326
        %v338 = vunpack.c.l.b16 %v304
        %v339 = vunpack.c.h.b16 %v304
        %v340 = vunpack.c.l.b16 %v305
        %v341 = vunpack.c.h.b16 %v305
        %v342 = vunpack.c.l.b16 %v306
        %v343 = vunpack.c.h.b16 %v306
        %v344 = vunpack.c.l.b16 %v307
        %v345 = vunpack.c.h.b16 %v307
        %v346 = vunpack.c.l.b16 %v308
        %v347 = vunpack.c.h.b16 %v308
        %v348 = vunpack.c.l.b16 %v309
        %v349 = vunpack.c.h.b16 %v309
        %v350 = vpack.c.b16 %v342, %v338
        %v351 = vpack.c.b16 %v343, %v339
        %v352 = vpack.c.b16 %v344, %v340
        %v353 = vpack.c.b16 %v345, %v341
        %v354 = vpack.c.b16 %v346, %v346
        %v355 = vpack.c.b16 %v347, %v347
        %v356 = vpack.c.b16 %v348, %v348
        %v357 = vpack.c.b16 %v349, %v349
        %vm362 = vcmask 162816
        %v364 = vsel %vm362, %v303, 0
        %vm366 = vcmask 1041408
        %v368 = vsel %vm366, %v354, 0
        %v371 = vsel %vm366, %v355, 0
        %v374 = vsel %vm366, %v356, 0
        %v377 = vsel %vm366, %v357, 0
        %379 = vmatprep.subr.bf16.mxu0 %v351
        %380 = vmatpush1.bf16.msra.mxu0 %v350
        %381 = vmatprep.subr.bf16.mxu0 %v371
        %382 = vmatpush1.bf16.msra.mxu0 %v368
        %383 = vmatprep.subr.bf16.mxu0 0
        %384 = vmatpush1.bf16.msra.mxu0 0
        %385 = vmatprep.subr.bf16.mxu0 0
        %386 = vmatpush1.bf16.msra.mxu0 0
        %387 = vmatprep.subr.bf16.mxu0 0
        %388 = vmatpush1.bf16.msra.mxu0 0
        %389 = vmatprep.subr.bf16.mxu0 0
        %390 = vmatpush1.bf16.msra.mxu0 0
        %391 = vmatprep.subr.bf16.mxu0 0
        %392 = vmatpush1.bf16.msra.mxu0 0
        %393 = vmatprep.subr.bf16.mxu0 0
        %394 = vmatpush1.bf16.msra.mxu0 0
        %395 = vmatprep.subr.bf16.mxu0 0
        %396 = vmatpush1.bf16.msra.mxu0 0
        %397 = vmatprep.subr.bf16.mxu0 0
        %398 = vmatpush1.bf16.msra.mxu0 0
        %399 = vmatprep.subr.bf16.mxu0 0
        %400 = vmatpush1.bf16.msra.mxu0 0
        %401 = vmatprep.subr.bf16.mxu0 0
        %402 = vmatpush1.bf16.msra.mxu0 0
        %403 = vmatprep.subr.bf16.mxu0 0
        %404 = vmatpush1.bf16.msra.mxu0 0
        %405 = vmatprep.subr.bf16.mxu0 0
        %406 = vmatpush1.bf16.msra.mxu0 0
        %407 = vmatprep.subr.bf16.mxu0 0
        %408 = vmatpush1.bf16.msra.mxu0 0
        %409 = vmatprep.subr.bf16.mxu0 0
        %410 = vmatpush1.bf16.msra.mxu0 0
        %411 = vmatprep.mubr.bf16.mxu0 0
        %412 = vmatmul.mubr.bf16.gmra.mrb[0].mxu0 %v364
        %v413 = vpop.f32.mrb[0].mxu0
        %v414 = vadd.f32 %v315, %v413
        %v415 = vpop.f32.mrb[0].mxu0
        %v416 = vadd.f32 %v319, %v415
        %v417 = vpop.f32.mrb[0].mxu0
        %v418 = vpop.f32.mrb[0].mxu0
        %419 = vdwg.mxu0
        %420 = vmatprep.subr.bf16.mxu0 %v353
        %421 = vmatpush1.bf16.msra.mxu0 %v352
        %422 = vmatprep.subr.bf16.mxu0 %v377
        %423 = vmatpush1.bf16.msra.mxu0 %v374
        %424 = vmatprep.subr.bf16.mxu0 0
        %425 = vmatpush1.bf16.msra.mxu0 0
        %426 = vmatprep.subr.bf16.mxu0 0
        %427 = vmatpush1.bf16.msra.mxu0 0
        %428 = vmatprep.subr.bf16.mxu0 0
        %429 = vmatpush1.bf16.msra.mxu0 0
        %430 = vmatprep.subr.bf16.mxu0 0
        %431 = vmatpush1.bf16.msra.mxu0 0
        %432 = vmatprep.subr.bf16.mxu0 0
        %433 = vmatpush1.bf16.msra.mxu0 0
        %434 = vmatprep.subr.bf16.mxu0 0
        %435 = vmatpush1.bf16.msra.mxu0 0
        %436 = vmatprep.subr.bf16.mxu0 0
        %437 = vmatpush1.bf16.msra.mxu0 0
        %438 = vmatprep.subr.bf16.mxu0 0
        %439 = vmatpush1.bf16.msra.mxu0 0
        %440 = vmatprep.subr.bf16.mxu0 0
        %441 = vmatpush1.bf16.msra.mxu0 0
        %442 = vmatprep.subr.bf16.mxu0 0
        %443 = vmatpush1.bf16.msra.mxu0 0
        %444 = vmatprep.subr.bf16.mxu0 0
        %445 = vmatpush1.bf16.msra.mxu0 0
        %446 = vmatprep.subr.bf16.mxu0 0
        %447 = vmatpush1.bf16.msra.mxu0 0
        %448 = vmatprep.subr.bf16.mxu0 0
        %449 = vmatpush1.bf16.msra.mxu0 0
        %450 = vmatprep.subr.bf16.mxu0 0
        %451 = vmatpush1.bf16.msra.mxu0 0
        %452 = vmatprep.mubr.bf16.mxu0 0
        %453 = vmatmul.mubr.bf16.gmra.mrb[0].mxu0 %v364
        %v454 = vpop.f32.mrb[0].mxu0
        %v455 = vadd.f32 %v323, %v454
        %v456 = vpop.f32.mrb[0].mxu0
        %v457 = vadd.f32 %v327, %v456
        %v458 = vpop.f32.mrb[0].mxu0
        %v459 = vpop.f32.mrb[0].mxu0
        %460 = vdwg.mxu0
        %v461 = vmax.f32 %v414, 0.0
        %v462 = vmax.f32 %v416, 0.0
        %v463 = vmax.f32 %v455, 0.0
        %v464 = vmax.f32 %v457, 0.0
        %v465 = vpack.c.bf16 %v461, %v461
        %v466 = vpack.c.bf16 %v462, %v462
        %v467 = vpack.c.bf16 %v463, %v463
        %v468 = vpack.c.bf16 %v464, %v464
        %v469 = vld [vmem:[%s261] sm:$0xf]
        %v470 = vld [vmem:[%s261 + $0x4] sm:$0xf]
        %v471 = vld [vmem:[%s261 + $0x8] sm:$0xf]
        %v472 = vld [vmem:[%s261 + $0xc] sm:$0xf]
        %v473 = vld [vmem:[%s261 + $0x10] sm:$0xf]
        %v474 = vld [vmem:[%s261 + $0x14] sm:$0xf]
        %v475 = vld [vmem:[%s261 + $0x18] sm:$0xf]
        %v476 = vld [vmem:[%s261 + $0x1c] sm:$0xf]
        %v477 = vld [vmem:[%s261 + $0x20] sm:$0xf]
        %v478 = vld [vmem:[%s261 + $0x24] sm:$0xf]
        %v479 = vld [vmem:[%s261 + $0x28] sm:$0xf]
        %v480 = vld [vmem:[%s261 + $0x2c] sm:$0xf]
        %v481 = vld [vmem:[%s261 + $0x30] sm:$0xf]
        %v482 = vld [vmem:[%s261 + $0x34] sm:$0xf]
        %v483 = vld [vmem:[%s261 + $0x38] sm:$0xf]
        %v484 = vld [vmem:[%s261 + $0x3c] sm:$0xf]
        %v485 = vld [vmem:[%s261 + $0x40] sm:$0xf]
        %v486 = vld [vmem:[%s261 + $0x44] sm:$0xf]
        %v487 = vld [vmem:[%s261 + $0x48] sm:$0xf]
        %v488 = vld [vmem:[%s261 + $0x4c] sm:$0xf]
        %v489 = vld [vmem:[%s261 + $0x50] sm:$0xf]
        %v490 = vld [vmem:[%s261 + $0x54] sm:$0xf]
        %v491 = vld [vmem:[%s261 + $0x58] sm:$0xf]
        %v492 = vld [vmem:[%s261 + $0x5c] sm:$0xf]
        %v493 = vld [vmem:[%s261 + $0x60] sm:$0xf]
        %v494 = vld [vmem:[%s261 + $0x64] sm:$0xf]
        %v495 = vld [vmem:[%s261 + $0x68] sm:$0xf]
        %v496 = vld [vmem:[%s261 + $0x6c] sm:$0xf]
        %v497 = vld [vmem:[%s261 + $0x70] sm:$0xf]
        %v498 = vld [vmem:[%s261 + $0x74] sm:$0xf]
        %v499 = vld [vmem:[%s261 + $0x78] sm:$0xf]
        %v500 = vld [vmem:[%s261 + $0x7c] sm:$0xf]
        %v501 = vld [vmem:[%s261 + $0x80] sm:$0xf]
        %v502 = vld [vmem:[%s261 + $0x84] sm:$0xf]
        %v503 = vld [vmem:[%s261 + $0x88] sm:$0xf]
        %v504 = vld [vmem:[%s261 + $0x8c] sm:$0xf]
        %v505 = vld [vmem:[%s261 + $0x90] sm:$0xf]
        %v506 = vld [vmem:[%s261 + $0x94] sm:$0xf]
        %v507 = vld [vmem:[%s261 + $0x98] sm:$0xf]
        %v508 = vld [vmem:[%s261 + $0x9c] sm:$0xf]
        %v509 = vld [vmem:[%s261 + $0xa0] sm:$0xf]
        %v510 = vld [vmem:[%s261 + $0xa4] sm:$0xf]
        %v511 = vld [vmem:[%s261 + $0xa8] sm:$0xf]
        %v512 = vld [vmem:[%s261 + $0xac] sm:$0xf]
        %v513 = vld [vmem:[%s261 + $0xb0] sm:$0xf]
        %v514 = vld [vmem:[%s261 + $0xb4] sm:$0xf]
        %v515 = vld [vmem:[%s261 + $0xb8] sm:$0xf]
        %v516 = vld [vmem:[%s261 + $0xbc] sm:$0xf]
        %v517 = vld [vmem:[%s261 + $0xc0] sm:$0xf]
        %v518 = vld [vmem:[%s261 + $0xc4] sm:$0xf]
        %v519 = vld [vmem:[%s301] sm:$0x1]
        %v521 = vlaneseq
        %v522 = vshrl.u32 %v521, 7
        %v523 = vsub.s32 0, %v522
        %v524 = vrot.slane %v519, %v523
        %v576 = vunpack.c.l.b16 %v469
        %v577 = vunpack.c.l.b16 %v470
        %v578 = vunpack.c.l.b16 %v471
        %v579 = vunpack.c.l.b16 %v472
        %v580 = vunpack.c.l.b16 %v473
        %v581 = vunpack.c.l.b16 %v474
        %v582 = vunpack.c.l.b16 %v475
        %v583 = vunpack.c.l.b16 %v476
        %v584 = vunpack.c.l.b16 %v477
        %v585 = vunpack.c.l.b16 %v478
        %v586 = vunpack.c.l.b16 %v479
        %v587 = vunpack.c.l.b16 %v480
        %v588 = vunpack.c.l.b16 %v481
        %v589 = vunpack.c.l.b16 %v482
        %v590 = vunpack.c.l.b16 %v483
        %v591 = vunpack.c.l.b16 %v484
        %v592 = vunpack.c.l.b16 %v485
        %v593 = vunpack.c.l.b16 %v486
        %v594 = vunpack.c.l.b16 %v487
        %v595 = vunpack.c.l.b16 %v488
        %v596 = vunpack.c.l.b16 %v489
        %v597 = vunpack.c.l.b16 %v490
        %v598 = vunpack.c.l.b16 %v491
        %v599 = vunpack.c.l.b16 %v492
        %v600 = vunpack.c.l.b16 %v493
        %v601 = vunpack.c.l.b16 %v494
        %v602 = vunpack.c.l.b16 %v495
        %v603 = vunpack.c.l.b16 %v496
        %v604 = vunpack.c.l.b16 %v497
        %v605 = vunpack.c.l.b16 %v498
        %v606 = vunpack.c.l.b16 %v499
        %v607 = vunpack.c.l.b16 %v500
        %v608 = vunpack.c.l.b16 %v501
        %v609 = vunpack.c.l.b16 %v502
        %v610 = vunpack.c.l.b16 %v503
        %v611 = vunpack.c.l.b16 %v504
        %v612 = vunpack.c.l.b16 %v505
        %v613 = vunpack.c.l.b16 %v506
        %v614 = vunpack.c.l.b16 %v507
        %v615 = vunpack.c.l.b16 %v508
        %v616 = vunpack.c.l.b16 %v509
        %v617 = vunpack.c.l.b16 %v510
        %v618 = vunpack.c.l.b16 %v511
        %v619 = vunpack.c.l.b16 %v512
        %v620 = vunpack.c.l.b16 %v513
        %v621 = vunpack.c.l.b16 %v514
        %v622 = vunpack.c.l.b16 %v515
        %v623 = vunpack.c.l.b16 %v516
        %v624 = vunpack.c.l.b16 %v517
        %v625 = vunpack.c.l.b16 %v518
        %v626 = vpack.c.b16 %v577, %v576
        %v627 = vpack.c.b16 %v579, %v578
        %v628 = vpack.c.b16 %v581, %v580
        %v629 = vpack.c.b16 %v583, %v582
        %v630 = vpack.c.b16 %v585, %v584
        %v631 = vpack.c.b16 %v587, %v586
        %v632 = vpack.c.b16 %v589, %v588
        %v633 = vpack.c.b16 %v591, %v590
        %v634 = vpack.c.b16 %v593, %v592
        %v635 = vpack.c.b16 %v595, %v594
        %v636 = vpack.c.b16 %v597, %v596
        %v637 = vpack.c.b16 %v599, %v598
        %v638 = vpack.c.b16 %v601, %v600
        %v639 = vpack.c.b16 %v603, %v602
        %v640 = vpack.c.b16 %v605, %v604
        %v641 = vpack.c.b16 %v607, %v606
        %v642 = vpack.c.b16 %v609, %v608
        %v643 = vpack.c.b16 %v611, %v610
        %v644 = vpack.c.b16 %v613, %v612
        %v645 = vpack.c.b16 %v615, %v614
        %v646 = vpack.c.b16 %v617, %v616
        %v647 = vpack.c.b16 %v619, %v618
        %v648 = vpack.c.b16 %v621, %v620
        %v649 = vpack.c.b16 %v623, %v622
        %v650 = vpack.c.b16 %v625, %v624
        %vm676 = vcmask 130048
        %v678 = vsel %vm676, %v468, 0
        %680 = vmatprep.subr.bf16.mxu0 0
        %681 = vmatpush1.bf16.msra.mxu0 %v626
        %682 = vmatprep.subr.bf16.mxu0 0
        %683 = vmatpush1.bf16.msra.mxu0 %v627
        %684 = vmatprep.subr.bf16.mxu0 0
        %685 = vmatpush1.bf16.msra.mxu0 %v628
        %686 = vmatprep.subr.bf16.mxu0 0
        %687 = vmatpush1.bf16.msra.mxu0 %v629
        %688 = vmatprep.subr.bf16.mxu0 0
        %689 = vmatpush1.bf16.msra.mxu0 %v630
        %690 = vmatprep.subr.bf16.mxu0 0
        %691 = vmatpush1.bf16.msra.mxu0 %v631
        %692 = vmatprep.subr.bf16.mxu0 0
        %693 = vmatpush1.bf16.msra.mxu0 %v632
        %694 = vmatprep.subr.bf16.mxu0 0
        %695 = vmatpush1.bf16.msra.mxu0 %v633
        %696 = vmatprep.subr.bf16.mxu0 0
        %697 = vmatpush1.bf16.msra.mxu0 %v634
        %698 = vmatprep.subr.bf16.mxu0 0
        %699 = vmatpush1.bf16.msra.mxu0 %v635
        %700 = vmatprep.subr.bf16.mxu0 0
        %701 = vmatpush1.bf16.msra.mxu0 %v636
        %702 = vmatprep.subr.bf16.mxu0 0
        %703 = vmatpush1.bf16.msra.mxu0 %v637
        %704 = vmatprep.subr.bf16.mxu0 0
        %705 = vmatpush1.bf16.msra.mxu0 %v638
        %706 = vmatprep.subr.bf16.mxu0 0
        %707 = vmatpush1.bf16.msra.mxu0 %v639
        %708 = vmatprep.subr.bf16.mxu0 0
        %709 = vmatpush1.bf16.msra.mxu0 %v640
        %710 = vmatprep.subr.bf16.mxu0 0
        %711 = vmatpush1.bf16.msra.mxu0 %v641
        %712 = vmatprep.mubr.bf16.mxu0 %v466
        %713 = vmatmul.mubr.bf16.gmra.mrb[0].mxu0 %v465
        %v714 = vpop.f32.mrb[0].mxu0
        %v715 = vadd.f32 %v524, %v714
        %v716 = vpop.f32.mrb[0].mxu0
        %v717 = vpop.f32.mrb[0].mxu0
        %v718 = vpop.f32.mrb[0].mxu0
        %719 = vdwg.mxu0
        %720 = vmatprep.subr.bf16.mxu0 0
        %721 = vmatpush1.bf16.msra.mxu0 %v642
        %722 = vmatprep.subr.bf16.mxu0 0
        %723 = vmatpush1.bf16.msra.mxu0 %v643
        %724 = vmatprep.subr.bf16.mxu0 0
        %725 = vmatpush1.bf16.msra.mxu0 %v644
        %726 = vmatprep.subr.bf16.mxu0 0
        %727 = vmatpush1.bf16.msra.mxu0 %v645
        %728 = vmatprep.subr.bf16.mxu0 0
        %729 = vmatpush1.bf16.msra.mxu0 %v646
        %730 = vmatprep.subr.bf16.mxu0 0
        %731 = vmatpush1.bf16.msra.mxu0 %v647
        %732 = vmatprep.subr.bf16.mxu0 0
        %733 = vmatpush1.bf16.msra.mxu0 %v648
        %734 = vmatprep.subr.bf16.mxu0 0
        %735 = vmatpush1.bf16.msra.mxu0 %v649
        %736 = vmatprep.subr.bf16.mxu0 0
        %737 = vmatpush1.bf16.msra.mxu0 %v650
        %738 = vmatprep.subr.bf16.mxu0 0
        %739 = vmatpush1.bf16.msra.mxu0 0
        %740 = vmatprep.subr.bf16.mxu0 0
        %741 = vmatpush1.bf16.msra.mxu0 0
        %742 = vmatprep.subr.bf16.mxu0 0
        %743 = vmatpush1.bf16.msra.mxu0 0
        %744 = vmatprep.subr.bf16.mxu0 0
        %745 = vmatpush1.bf16.msra.mxu0 0
        %746 = vmatprep.subr.bf16.mxu0 0
        %747 = vmatpush1.bf16.msra.mxu0 0
        %748 = vmatprep.subr.bf16.mxu0 0
        %749 = vmatpush1.bf16.msra.mxu0 0
        %750 = vmatprep.subr.bf16.mxu0 0
        %751 = vmatpush1.bf16.msra.mxu0 0
        %752 = vmatprep.mubr.bf16.mxu0 %v678
        %753 = vmatmul.mubr.bf16.gmra.mrb[0].mxu0 %v467
        %v754 = vpop.f32.mrb[0].mxu0
        %v755 = vadd.f32 %v715, %v754
        %v756 = vpop.f32.mrb[0].mxu0
        %v757 = vpop.f32.mrb[0].mxu0
        %v758 = vpop.f32.mrb[0].mxu0
        %759 = vdwg.mxu0
        %v760 = vmul.f32 %v755, 0.5
        %v761 = vtanh.pop %v760
        %v762 = vmul.f32 %v761, 0.5
        %v763 = vadd.f32 %v762, 0.5
        %v764 = vpack.c.bf16 %v763, %v763
        %765 = vst [vmem:[%s294] sm:$0xf] %v764
        %s766 = sand.u32 %s165, 1
        %s767 = scalar_lea.sflag [#allocation4], %s766
        %s768 = sand.u32 %s165, 1
        %s769 = smul.addr %s768, 4
        %s770 = scalar_lea.vmem [#allocation7], %s769
        // Predicated region
        $region49: #{decoder_forward.1} parent=39 // pred_check
          %p771 = pneg %p175
        $region50: #{decoder_forward.1} parent=39 // pred_check_branch
          %773 = sbr.rel (%p771) target = $region52
        $region51: #{decoder_forward.1} parent=39 // pred_region
          %s775 = ssub.s32 64, 64
          %776 = vsyncadd %s767, %s775
          %s777 = smul.addr %s27, 7
          %s778 = sadd.s32 %s28, %s777
          %s779 = smul.addr %s778, 64
          %s780 = scalar_lea.hbm %s5, %s779
          %s782 = sshll.u32 %s770, 4
          %s783 = int_to_ptr.vmem [resolvable:$true] %s782
          %785 = dma.vmem_to_hbm [thread:$0]  %s783, 64, %s780, %s767
        $region52: #{decoder_forward.1} parent=39 // pred_fallthru
          _
      $region40: #{decoder_forward.1} parent=5 // pred_fallthru
        _
      %p786 = scmp.le.s32.totalorder 2, %s18
      // Predicated region
      $region53: #{decoder_forward.1} parent=5 // pred_check
        %p787 = pneg %p786
      $region54: #{decoder_forward.1} parent=5 // pred_check_branch
        %789 = sbr.rel (%p787) target = $region56
      $region55: #{decoder_forward.1} parent=5 // pred_region
        %s790 = ssub.s32 %s18, 2
        // Predicated region
        $region57: #{decoder_forward.1} parent=55 // pred_check
          %p791 = pneg %p181
        $region58: #{decoder_forward.1} parent=55 // pred_check_branch
          %793 = sbr.rel (%p791) target = $region60
        $region59: #{decoder_forward.1} parent=55 // pred_region
          %s794 = sand.u32 %s166, 1
          %s795 = scalar_lea.sflag [#allocation4], %s794
          %s796 = sand.u32 %s166, 1
          %s797 = smul.addr %s796, 4
          %s798 = scalar_lea.vmem [#allocation7], %s797
          %799 = dma.done %s795, 64
        $region60: #{decoder_forward.1} parent=55 // pred_fallthru
          _
      $region56: #{decoder_forward.1} parent=5 // pred_fallthru
        _
    $region6: #{decoder_forward.1} parent=1 // loop_footer
      %s22 = sadd.s32 1, %s18
    $region7: #{decoder_forward.1} parent=1 // loop_footer_branch
      %17 = sbr.rel target = $region3
    $region8: #{decoder_forward.1} parent=1 // loop_exit
      _
    %800 = vsyncpa [#allocation3], 1
    %s801 = scalar_lea.sflag [#allocation3], 1
    %802 = vsyncpa %s801, 1
    %803 = vsyncpa [#allocation6], 1
    %s804 = scalar_lea.sflag [#allocation6], 1
    %805 = vsyncpa %s804, 1
    %806 = vsyncpa [#allocation4], 1
    %s807 = scalar_lea.sflag [#allocation4], 1
    %808 = vsyncpa %s807, 1

</llo_original>
